<compile_context>
chip_gen: v6e
topology: v6e:2x2x1
jax: 0.10.0
libtpu: 0.0.40
codegen_flags: <defaults>
</compile_context>

<pallas_src>
import math

import jax
import jax.numpy as jnp
from jax.experimental import pallas as pl
from jax.experimental.pallas import tpu as pltpu

_LANES = 128
_TARGET_BLOCK_BYTES = 2 << 20      # ~2 MiB of padded VMEM per block buffer
_VMEM_BUDGET_BYTES = 40 << 20      # total 2x(in+out) block budget (v7x-safe)
_VMEM_LIMIT_BYTES = 48 << 20       # scoped VMEM limit handed to Mosaic


def _cdiv(a, b):
    return -(-a // b)


def _sublane_pack(dtype):
    # Packed sublane count of the TPU tiled layout per dtype width.
    return {4: 8, 2: 16, 1: 32}.get(jnp.dtype(dtype).itemsize, 8)


def _padded_slice_bytes(h, w, dtype):
    """Bytes of one (H, W) slice under the TPU (sublane, 128) tiled layout."""
    it = jnp.dtype(dtype).itemsize
    sp = _sublane_pack(dtype)
    return _cdiv(max(h, 1), sp) * sp * _cdiv(max(w, 1), _LANES) * _LANES * it


def _canonical_view(x):
    """Layout-preserving (M, H, W) view.

    Only leading dims are merged; the last two (physically tiled) dims are
    kept untouched, so this reshape never materializes a relayout copy on TPU.
    """
    if x.ndim >= 3:
        m = math.prod(x.shape[:-2])
        return x.reshape(m, x.shape[-2], x.shape[-1])
    if x.ndim == 2:
        return x.reshape(1, x.shape[0], x.shape[1])
    return x.reshape(1, 1, x.shape[0])      # 1-D


def _plan(views):
    """Pick one common grid length and per-component leading-dim block sizes."""
    ms = [v.shape[0] for v in views]
    slice_bytes = [_padded_slice_bytes(v.shape[1], v.shape[2], v.dtype)
                   for v in views]

    def make(target):
        bm_t = [max(1, min(m, target // sb)) for m, sb in zip(ms, slice_bytes)]
        grid = max(_cdiv(m, b) for m, b in zip(ms, bm_t))
        bms = [max(1, _cdiv(m, grid)) for m in ms]          # equalize block counts
        nblocks = [_cdiv(m, b) for m, b in zip(ms, bms)]
        # 2 double-buffers x (in + out) per component.
        total = sum(4 * b * sb for b, sb in zip(bms, slice_bytes))
        return grid, bms, nblocks, total

    grid, bms, nblocks, total = make(_TARGET_BLOCK_BYTES)
    if total > _VMEM_BUDGET_BYTES:
        # One proportional shrink pass keeps the fused call inside the budget.
        target = max(1, (_TARGET_BLOCK_BYTES * _VMEM_BUDGET_BYTES) // total)
        grid, bms, nblocks, total = make(target)
    return grid, bms, nblocks, total


def _fused_relu_call(views, grid, bms, nblocks):
    """One pallas_call applying ReLU to every (M, H, W) component view."""
    n = len(views)

    def make_imap(nb):
        if nb == grid:
            return lambda i: (i, 0, 0)
        if nb == 1:
            return lambda i: (0, 0, 0)
        # Clamp: past this component's last block the index stops changing, so
        # its buffers stay resident; the body is guarded by pl.when below.
        return lambda i, nb=nb: (jnp.minimum(i, nb - 1), 0, 0)

    in_specs = [pl.BlockSpec((bm, v.shape[1], v.shape[2]), make_imap(nb))
                for v, bm, nb in zip(views, bms, nblocks)]
    out_specs = tuple(pl.BlockSpec((bm, v.shape[1], v.shape[2]), make_imap(nb))
                      for v, bm, nb in zip(views, bms, nblocks))
    out_shape = tuple(jax.ShapeDtypeStruct(v.shape, v.dtype) for v in views)

    # Common octave case: every component has exactly `grid` blocks -> pure
    # "parallel" axis (v7x dual-TensorCore sharding).  Only revisited (clamped)
    # outputs force "arbitrary".
    all_equal = all(nb == grid for nb in nblocks)
    sem = "parallel" if all_equal else "arbitrary"

    def kernel(*refs):
        i = pl.program_id(0)
        for idx in range(n):
            x_ref = refs[idx]
            o_ref = refs[n + idx]
            nb = nblocks[idx]

            def body(x_ref=x_ref, o_ref=o_ref):
                o_ref[...] = jnp.maximum(x_ref[...], 0)   # load + max + one store

            if nb == grid:
                body()
            else:
                # Skip recompute/stores on tail iterations of clamped components.
                pl.when(i < nb)(body)

    total_bytes = sum(v.size * jnp.dtype(v.dtype).itemsize for v in views)
    cost = pl.CostEstimate(flops=sum(v.size for v in views),
                           transcendentals=0,
                           bytes_accessed=2 * total_bytes)

    # TODO(synk): input_output_aliases={j: j} would make this in-place like
    # torch's inplace ReLU, but requires donated inputs at the jit boundary to
    # avoid a defensive copy; left off so callers may keep using the inputs.
    return pl.pallas_call(
        kernel,
        out_shape=out_shape,
        grid=(grid,),
        in_specs=in_specs,
        out_specs=out_specs,
        compiler_params=pltpu.CompilerParams(
            dimension_semantics=(sem,),
            vmem_limit_bytes=_VMEM_LIMIT_BYTES),
        cost_estimate=cost,
    )(*views)


def _relu_pallas_multi(xs):
    """Apply ReLU to a whole multi-octave list with a single fused kernel."""
    results = [None] * len(xs)
    idxs, views = [], []
    for i, xi in enumerate(xs):
        if xi is None:
            continue
        if xi.ndim == 0 or xi.size == 0:
            # TODO(synk): 0-d / empty components have nothing to tile.
            results[i] = jnp.maximum(xi, 0)
            continue
        v = _canonical_view(xi)
        if 4 * _padded_slice_bytes(v.shape[1], v.shape[2], v.dtype) > _VMEM_BUDGET_BYTES // 2:
            # TODO(synk): a single (H, W) slice too large to double-buffer; would
            # need a second tiling axis over H -- fall back to plain jnp.
            results[i] = jnp.maximum(xi, 0)
            continue
        idxs.append(i)
        views.append(v)
    if views:
        grid, bms, nblocks, _ = _plan(views)
        outs = _fused_relu_call(views, grid, bms, nblocks)
        for i, o in zip(idxs, outs):
            results[i] = o.reshape(xs[i].shape)   # inverse leading-dim merge
    return results


class _PallasReLU:
    """ReLU activation object; exposes a fused multi-octave path."""

    def __call__(self, x):
        return _relu_pallas_multi([x])[0]

    def apply_multi(self, xs):
        return _relu_pallas_multi(xs)


def _make_relu(**kwargs):
    # Mirrors torch.nn.ReLU(**kwargs); `inplace` is irrelevant functionally.
    del kwargs
    return _PallasReLU()


def func_over_freq(x, func):
    """octUtils.func_over_freq: map `func` over each octave component."""
    if func is None:
        return x
    if hasattr(func, "apply_multi"):
        return func.apply_multi(x)       # fused: one pallas_call for all octaves
    return [None if xi is None else func(xi) for xi in x]


class MultiOctActiv:
    """JAX/Pallas port of MultiOctActiv."""

    def __init__(self, activation_function, activation_function_args):
        self.activation = (None if activation_function is None
                           else activation_function(**activation_function_args))

    def set_activation_function(self, activation_function, activation_function_args):
        self.activation = (None if activation_function is None
                           else activation_function(**activation_function_args))

    def __call__(self, x):
        return func_over_freq(x, self.activation)


if __name__ == "__main__":
    key = jax.random.PRNGKey(0)
    keys = jax.random.split(key, 7)

    module = MultiOctActiv(_make_relu, {})

    # Standard multi-octave input: NCHW, spatial halved per octave, one None slot.
    batch, ch = 2, 4
    x = [
        jax.random.normal(keys[0], (batch, ch, 16, 16), dtype=jnp.float32),
        jax.random.normal(keys[1], (batch, ch, 8, 8), dtype=jnp.float32),
        jax.random.normal(keys[2], (batch, ch, 4, 4), dtype=jnp.float32),
        None,
    ]
    out = module(x)
    out = [o if o is None else jax.block_until_ready(o) for o in out]
    for xi, oi in zip(x, out):
        if xi is None:
            assert oi is None
            continue
        ref = jnp.maximum(xi, 0)
        assert oi.shape == xi.shape and oi.dtype == xi.dtype
        assert jnp.array_equal(oi, ref)

    # Stress the multi-block / ragged / clamped planner paths (large leading
    # dim with a ragged last block, odd spatial dims, bf16, tiny component).
    y = [
        jax.random.normal(keys[3], (1, 241, 32, 32), dtype=jnp.float32),
        jax.random.normal(keys[4], (2, 3, 5, 7), dtype=jnp.float32),
        jax.random.normal(keys[5], (batch, ch, 8, 8)).astype(jnp.bfloat16),
        jax.random.normal(keys[6], (1, 1, 8, 8), dtype=jnp.float32),
    ]
    out_y = module(y)
    out_y = [jax.block_until_ready(o) for o in out_y]
    for yi, oi in zip(y, out_y):
        ref = jnp.maximum(yi, 0)
        assert oi.shape == yi.shape and oi.dtype == yi.dtype
        assert jnp.array_equal(oi, ref)

    print("KERNEL_OK")
</pallas_src>

<mosaic_0001>
module attributes {stable_mosaic.version = 11 : i64} {
  func.func @kernel(%arg0: i32, %arg1: memref<8x16x16xf32, #tpu.memory_space<vmem>>, %arg2: memref<8x8x8xf32, #tpu.memory_space<vmem>>, %arg3: memref<8x4x4xf32, #tpu.memory_space<vmem>>, %arg4: memref<8x16x16xf32, #tpu.memory_space<vmem>>, %arg5: memref<8x8x8xf32, #tpu.memory_space<vmem>>, %arg6: memref<8x4x4xf32, #tpu.memory_space<vmem>>) attributes {dimension_semantics = [#tpu.dimension_semantics<parallel>], iteration_bounds = array<i64: 1>, scalar_prefetch = 0 : i64, scratch_operands = 0 : i64, tpu.core_type = #tpu.core_type<tc>, window_params = [{transform_indices = @transform_0, window_bounds = array<i64: 8, 16, 16>}, {transform_indices = @transform_1, window_bounds = array<i64: 8, 8, 8>}, {transform_indices = @transform_2, window_bounds = array<i64: 8, 4, 4>}, {transform_indices = @transform_3, window_bounds = array<i64: 8, 16, 16>}, {transform_indices = @transform_4, window_bounds = array<i64: 8, 8, 8>}, {transform_indices = @transform_5, window_bounds = array<i64: 8, 4, 4>}]} {
    %c0 = arith.constant 0 : index
    %c0_0 = arith.constant 0 : index
    %c0_1 = arith.constant 0 : index
    %0 = vector.load %arg1[%c0, %c0_0, %c0_1] : memref<8x16x16xf32, #tpu.memory_space<vmem>>, vector<8x16x16xf32>
    %cst = arith.constant 0.000000e+00 : f32
    %1 = vector.broadcast %cst : f32 to vector<8x16x16xf32>
    %2 = arith.maximumf %0, %1 : vector<8x16x16xf32>
    %c0_2 = arith.constant 0 : index
    %c0_3 = arith.constant 0 : index
    %c0_4 = arith.constant 0 : index
    %3 = vector.load %arg4[%c0_2, %c0_3, %c0_4] : memref<8x16x16xf32, #tpu.memory_space<vmem>>, vector<8x16x16xf32>
    tpu.vector_store %arg4[%c0_2, %c0_3, %c0_4], %2 {strides = array<i32>} : memref<8x16x16xf32, #tpu.memory_space<vmem>>, vector<8x16x16xf32>,
    %c0_5 = arith.constant 0 : index
    %c0_6 = arith.constant 0 : index
    %c0_7 = arith.constant 0 : index
    %4 = vector.load %arg2[%c0_5, %c0_6, %c0_7] : memref<8x8x8xf32, #tpu.memory_space<vmem>>, vector<8x8x8xf32>
    %cst_8 = arith.constant 0.000000e+00 : f32
    %5 = vector.broadcast %cst_8 : f32 to vector<8x8x8xf32>
    %6 = arith.maximumf %4, %5 : vector<8x8x8xf32>
    %c0_9 = arith.constant 0 : index
    %c0_10 = arith.constant 0 : index
    %c0_11 = arith.constant 0 : index
    %7 = vector.load %arg5[%c0_9, %c0_10, %c0_11] : memref<8x8x8xf32, #tpu.memory_space<vmem>>, vector<8x8x8xf32>
    tpu.vector_store %arg5[%c0_9, %c0_10, %c0_11], %6 {strides = array<i32>} : memref<8x8x8xf32, #tpu.memory_space<vmem>>, vector<8x8x8xf32>,
    %c0_12 = arith.constant 0 : index
    %c0_13 = arith.constant 0 : index
    %c0_14 = arith.constant 0 : index
    %8 = vector.load %arg3[%c0_12, %c0_13, %c0_14] : memref<8x4x4xf32, #tpu.memory_space<vmem>>, vector<8x4x4xf32>
    %cst_15 = arith.constant 0.000000e+00 : f32
    %9 = vector.broadcast %cst_15 : f32 to vector<8x4x4xf32>
    %10 = arith.maximumf %8, %9 : vector<8x4x4xf32>
    %c0_16 = arith.constant 0 : index
    %c0_17 = arith.constant 0 : index
    %c0_18 = arith.constant 0 : index
    %11 = vector.load %arg6[%c0_16, %c0_17, %c0_18] : memref<8x4x4xf32, #tpu.memory_space<vmem>>, vector<8x4x4xf32>
    tpu.vector_store %arg6[%c0_16, %c0_17, %c0_18], %10 {strides = array<i32>} : memref<8x4x4xf32, #tpu.memory_space<vmem>>, vector<8x4x4xf32>,
    return
  }
  func.func @transform_0(%arg0: i32) -> (i32, i32, i32) {
    %c0_i32 = arith.constant 0 : i32
    %c0_i32_0 = arith.constant 0 : i32
    %c0_i32_1 = arith.constant 0 : i32
    return %arg0, %c0_i32, %c0_i32_0 : i32, i32, i32
  }
  func.func @transform_1(%arg0: i32) -> (i32, i32, i32) {
    %c0_i32 = arith.constant 0 : i32
    %c0_i32_0 = arith.constant 0 : i32
    %c0_i32_1 = arith.constant 0 : i32
    return %arg0, %c0_i32, %c0_i32_0 : i32, i32, i32
  }
  func.func @transform_2(%arg0: i32) -> (i32, i32, i32) {
    %c0_i32 = arith.constant 0 : i32
    %c0_i32_0 = arith.constant 0 : i32
    %c0_i32_1 = arith.constant 0 : i32
    return %arg0, %c0_i32, %c0_i32_0 : i32, i32, i32
  }
  func.func @transform_3(%arg0: i32) -> (i32, i32, i32) {
    %c0_i32 = arith.constant 0 : i32
    %c0_i32_0 = arith.constant 0 : i32
    %c0_i32_1 = arith.constant 0 : i32
    return %arg0, %c0_i32, %c0_i32_0 : i32, i32, i32
  }
  func.func @transform_4(%arg0: i32) -> (i32, i32, i32) {
    %c0_i32 = arith.constant 0 : i32
    %c0_i32_0 = arith.constant 0 : i32
    %c0_i32_1 = arith.constant 0 : i32
    return %arg0, %c0_i32, %c0_i32_0 : i32, i32, i32
  }
  func.func @transform_5(%arg0: i32) -> (i32, i32, i32) {
    %c0_i32 = arith.constant 0 : i32
    %c0_i32_0 = arith.constant 0 : i32
    %c0_i32_1 = arith.constant 0 : i32
    return %arg0, %c0_i32, %c0_i32_0 : i32, i32, i32
  }
}

</mosaic_0001>

<llo_original>
// kernel: tpu_custom_call.1
$region0: #{tpu_custom_call.1}
  #allocation0 [shape = 'u32[]', space=smem, size = 0x4, offset = 0x4, fixed_abs, tag = 'smem constant byte address 0x4 - core index']
  #allocation1 [shape = 'u32[144,128]{1,0:T(1,128)}', space=vmem, size = 0x12000, scoped, tag = 'internal scratch']
  %s0 = inlined_call_operand.hbm [shape: f32[8,16,16], index: 0, kind: input, shape index: {}]
  %s1 = inlined_call_operand.hbm [shape: f32[8,8,8], index: 1, kind: input, shape index: {}]
  %s2 = inlined_call_operand.vmem [shape: f32[8,4,4], index: 2, kind: input, shape index: {}]
  %s3 = inlined_call_operand.hbm [shape: f32[8,16,16], index: 3, kind: output, shape index: {0}]
  %s4 = inlined_call_operand.hbm [shape: f32[8,8,8], index: 4, kind: output, shape index: {1}]
  %s5 = inlined_call_operand.vmem [shape: f32[8,4,4], index: 5, kind: output, shape index: {2}]
  %6 = xla_tuple %s3, %s4, %s5
  %s7 = sld [smem:[#allocation0]]
  $region46: #{tpu_custom_call.1} parent=0
    _
  %s9 = ssub.s32 1, %s7
  %s10 = scalar_select 0, %s9, %s7
  $region1: #{tpu_custom_call.1} parent=0
    #allocation2 [shape = 'u8[65536]{0}', space=vmem, size = 0x10000, scoped, tag = 'input window, operand 0, single buffered']
    #allocation3 [shape = 's32[1]{0}', space=sflag, size = 0x4, scoped, tag = 'scoped memory for tpu_custom_call.1']
    #allocation4 [shape = 's32[1]{0}', space=sflag, size = 0x4, scoped, tag = 'scoped memory for tpu_custom_call.1']
    #allocation5 [shape = 'u8[32768]{0}', space=vmem, size = 0x8000, scoped, tag = 'input window, operand 1, single buffered']
    #allocation6 [shape = 's32[1]{0}', space=sflag, size = 0x4, scoped, tag = 'scoped memory for tpu_custom_call.1']
    #allocation7 [shape = 'u8[65536]{0}', space=vmem, size = 0x10000, scoped, tag = 'output window, operand 0, single buffered']
    #allocation8 [shape = 'u8[32768]{0}', space=vmem, size = 0x8000, scoped, tag = 'output window, operand 1, single buffered']
    #allocation9 [shape = 's32[1]{0}', space=sflag, size = 0x4, scoped, tag = 'scoped memory for tpu_custom_call.1']
    %11 = vsyncpa [#allocation3], 0
    %12 = vsyncpa [#allocation6], 0
    %13 = vsyncpa [#allocation4], 0
    %14 = vsyncpa [#allocation9], 0
    // Predicated region
    $region2: #{tpu_custom_call.1} parent=1 // pred_check
      _
    $region3: #{tpu_custom_call.1} parent=1 // pred_check_branch
      %16 = sbr.rel (0) target = $region5
    $region4: #{tpu_custom_call.1} parent=1 // pred_region
      %s18 = ssub.s32 2048, 2048
      %19 = vsyncadd [#allocation3], %s18
      %s20 = sshll.u32 [#allocation2], 4
      %s21 = int_to_ptr.vmem [resolvable:$true] %s20
      %26 = dma.hbm_to_vmem [thread:$0]  %s0, 2048, %s21, [#allocation3], 128, 128, 8
    $region5: #{tpu_custom_call.1} parent=1 // pred_fallthru
      _
    // Predicated region
    $region6: #{tpu_custom_call.1} parent=1 // pred_check
      _
    $region7: #{tpu_custom_call.1} parent=1 // pred_check_branch
      %28 = sbr.rel (0) target = $region9
    $region8: #{tpu_custom_call.1} parent=1 // pred_region
      %s30 = ssub.s32 1024, 1024
      %31 = vsyncadd [#allocation6], %s30
      %s32 = sshll.u32 [#allocation5], 4
      %s33 = int_to_ptr.vmem [resolvable:$true] %s32
      %38 = dma.hbm_to_vmem [thread:$0]  %s1, 1024, %s33, [#allocation6], 128, 128, 8
    $region9: #{tpu_custom_call.1} parent=1 // pred_fallthru
      _
    // Predicated region
    $region10: #{tpu_custom_call.1} parent=1 // pred_check
      _
    $region11: #{tpu_custom_call.1} parent=1 // pred_check_branch
      %40 = sbr.rel (0) target = $region13
    $region12: #{tpu_custom_call.1} parent=1 // pred_region
      _
    $region13: #{tpu_custom_call.1} parent=1 // pred_fallthru
      _
    // Predicated region
    $region14: #{tpu_custom_call.1} parent=1 // pred_check
      _
    $region15: #{tpu_custom_call.1} parent=1 // pred_check_branch
      %42 = sbr.rel (0) target = $region17
    $region16: #{tpu_custom_call.1} parent=1 // pred_region
      %43 = dma.done [#allocation3], 2048
    $region17: #{tpu_custom_call.1} parent=1 // pred_fallthru
      _
    // Predicated region
    $region18: #{tpu_custom_call.1} parent=1 // pred_check
      _
    $region19: #{tpu_custom_call.1} parent=1 // pred_check_branch
      %45 = sbr.rel (0) target = $region21
    $region20: #{tpu_custom_call.1} parent=1 // pred_region
      %46 = dma.done [#allocation6], 1024
    $region21: #{tpu_custom_call.1} parent=1 // pred_fallthru
      _
    %v47 = vld [vmem:[#allocation2] sm:$0xff]
    %v48 = vld [vmem:[#allocation2 + $0x8] sm:$0xff]
    %v49 = vld [vmem:[#allocation2 + $0x10] sm:$0xff]
    %v50 = vld [vmem:[#allocation2 + $0x18] sm:$0xff]
    %v51 = vld [vmem:[#allocation2 + $0x20] sm:$0xff]
    %v52 = vld [vmem:[#allocation2 + $0x28] sm:$0xff]
    %v53 = vld [vmem:[#allocation2 + $0x30] sm:$0xff]
    %v54 = vld [vmem:[#allocation2 + $0x38] sm:$0xff]
    %v55 = vld [vmem:[#allocation2 + $0x40] sm:$0xff]
    %v56 = vld [vmem:[#allocation2 + $0x48] sm:$0xff]
    %v57 = vld [vmem:[#allocation2 + $0x50] sm:$0xff]
    %v58 = vld [vmem:[#allocation2 + $0x58] sm:$0xff]
    %v59 = vld [vmem:[#allocation2 + $0x60] sm:$0xff]
    %v60 = vld [vmem:[#allocation2 + $0x68] sm:$0xff]
    %v61 = vld [vmem:[#allocation2 + $0x70] sm:$0xff]
    %v62 = vld [vmem:[#allocation2 + $0x78] sm:$0xff]
    %v63 = vmax.f32 %v47, 0.0
    %v64 = vmax.f32 %v48, 0.0
    %v65 = vmax.f32 %v49, 0.0
    %v66 = vmax.f32 %v50, 0.0
    %v67 = vmax.f32 %v51, 0.0
    %v68 = vmax.f32 %v52, 0.0
    %v69 = vmax.f32 %v53, 0.0
    %v70 = vmax.f32 %v54, 0.0
    %v71 = vmax.f32 %v55, 0.0
    %v72 = vmax.f32 %v56, 0.0
    %v73 = vmax.f32 %v57, 0.0
    %v74 = vmax.f32 %v58, 0.0
    %v75 = vmax.f32 %v59, 0.0
    %v76 = vmax.f32 %v60, 0.0
    %v77 = vmax.f32 %v61, 0.0
    %v78 = vmax.f32 %v62, 0.0
    %vm79 = vcmask 130048
    %80 = vst.msk [vmem:[#allocation7] sm:$0xff] %vm79, %v63
    %81 = vst.msk [vmem:[#allocation7 + $0x8] sm:$0xff] %vm79, %v64
    %82 = vst.msk [vmem:[#allocation7 + $0x10] sm:$0xff] %vm79, %v65
    %83 = vst.msk [vmem:[#allocation7 + $0x18] sm:$0xff] %vm79, %v66
    %84 = vst.msk [vmem:[#allocation7 + $0x20] sm:$0xff] %vm79, %v67
    %85 = vst.msk [vmem:[#allocation7 + $0x28] sm:$0xff] %vm79, %v68
    %86 = vst.msk [vmem:[#allocation7 + $0x30] sm:$0xff] %vm79, %v69
    %87 = vst.msk [vmem:[#allocation7 + $0x38] sm:$0xff] %vm79, %v70
    %88 = vst.msk [vmem:[#allocation7 + $0x40] sm:$0xff] %vm79, %v71
    %89 = vst.msk [vmem:[#allocation7 + $0x48] sm:$0xff] %vm79, %v72
    %90 = vst.msk [vmem:[#allocation7 + $0x50] sm:$0xff] %vm79, %v73
    %91 = vst.msk [vmem:[#allocation7 + $0x58] sm:$0xff] %vm79, %v74
    %92 = vst.msk [vmem:[#allocation7 + $0x60] sm:$0xff] %vm79, %v75
    %93 = vst.msk [vmem:[#allocation7 + $0x68] sm:$0xff] %vm79, %v76
    %94 = vst.msk [vmem:[#allocation7 + $0x70] sm:$0xff] %vm79, %v77
    %95 = vst.msk [vmem:[#allocation7 + $0x78] sm:$0xff] %vm79, %v78
    %v96 = vld [vmem:[#allocation5] sm:$0xff]
    %v97 = vld [vmem:[#allocation5 + $0x8] sm:$0xff]
    %v98 = vld [vmem:[#allocation5 + $0x10] sm:$0xff]
    %v99 = vld [vmem:[#allocation5 + $0x18] sm:$0xff]
    %v100 = vld [vmem:[#allocation5 + $0x20] sm:$0xff]
    %v101 = vld [vmem:[#allocation5 + $0x28] sm:$0xff]
    %v102 = vld [vmem:[#allocation5 + $0x30] sm:$0xff]
    %v103 = vld [vmem:[#allocation5 + $0x38] sm:$0xff]
    %v104 = vmax.f32 %v96, 0.0
    %v105 = vmax.f32 %v97, 0.0
    %v106 = vmax.f32 %v98, 0.0
    %v107 = vmax.f32 %v99, 0.0
    %v108 = vmax.f32 %v100, 0.0
    %v109 = vmax.f32 %v101, 0.0
    %v110 = vmax.f32 %v102, 0.0
    %v111 = vmax.f32 %v103, 0.0
    %vm112 = vcmask 64512
    %113 = vst.msk [vmem:[#allocation8] sm:$0xff] %vm112, %v104
    %114 = vst.msk [vmem:[#allocation8 + $0x8] sm:$0xff] %vm112, %v105
    %115 = vst.msk [vmem:[#allocation8 + $0x10] sm:$0xff] %vm112, %v106
    %116 = vst.msk [vmem:[#allocation8 + $0x18] sm:$0xff] %vm112, %v107
    %117 = vst.msk [vmem:[#allocation8 + $0x20] sm:$0xff] %vm112, %v108
    %118 = vst.msk [vmem:[#allocation8 + $0x28] sm:$0xff] %vm112, %v109
    %119 = vst.msk [vmem:[#allocation8 + $0x30] sm:$0xff] %vm112, %v110
    %120 = vst.msk [vmem:[#allocation8 + $0x38] sm:$0xff] %vm112, %v111
    %v121 = vld [vmem:[%s2] sm:$0xf]
    %v122 = vld [vmem:[%s2 + $0x4] sm:$0xf]
    %v123 = vld [vmem:[%s2 + $0x8] sm:$0xf]
    %v124 = vld [vmem:[%s2 + $0xc] sm:$0xf]
    %v125 = vld [vmem:[%s2 + $0x10] sm:$0xf]
    %v126 = vld [vmem:[%s2 + $0x14] sm:$0xf]
    %v127 = vld [vmem:[%s2 + $0x18] sm:$0xf]
    %v128 = vld [vmem:[%s2 + $0x1c] sm:$0xf]
    %v129 = vmax.f32 %v121, 0.0
    %v130 = vmax.f32 %v122, 0.0
    %v131 = vmax.f32 %v123, 0.0
    %v132 = vmax.f32 %v124, 0.0
    %v133 = vmax.f32 %v125, 0.0
    %v134 = vmax.f32 %v126, 0.0
    %v135 = vmax.f32 %v127, 0.0
    %v136 = vmax.f32 %v128, 0.0
    %vm137 = vcmask 27648
    %138 = vst.msk [vmem:[%s5] sm:$0xf] %vm137, %v129
    %139 = vst.msk [vmem:[%s5 + $0x4] sm:$0xf] %vm137, %v130
    %140 = vst.msk [vmem:[%s5 + $0x8] sm:$0xf] %vm137, %v131
    %141 = vst.msk [vmem:[%s5 + $0xc] sm:$0xf] %vm137, %v132
    %142 = vst.msk [vmem:[%s5 + $0x10] sm:$0xf] %vm137, %v133
    %143 = vst.msk [vmem:[%s5 + $0x14] sm:$0xf] %vm137, %v134
    %144 = vst.msk [vmem:[%s5 + $0x18] sm:$0xf] %vm137, %v135
    %145 = vst.msk [vmem:[%s5 + $0x1c] sm:$0xf] %vm137, %v136
    // Predicated region
    $region22: #{tpu_custom_call.1} parent=1 // pred_check
      _
    $region23: #{tpu_custom_call.1} parent=1 // pred_check_branch
      %147 = sbr.rel (0) target = $region25
    $region24: #{tpu_custom_call.1} parent=1 // pred_region
      %s149 = ssub.s32 2048, 2048
      %150 = vsyncadd [#allocation4], %s149
      %s151 = sshll.u32 [#allocation7], 4
      %s152 = int_to_ptr.vmem [resolvable:$true] %s151
      %157 = dma.vmem_to_hbm [thread:$0]  %s152, 2048, %s3, [#allocation4], 128, 128, 8
    $region25: #{tpu_custom_call.1} parent=1 // pred_fallthru
      _
    // Predicated region
    $region26: #{tpu_custom_call.1} parent=1 // pred_check
      _
    $region27: #{tpu_custom_call.1} parent=1 // pred_check_branch
      %159 = sbr.rel (0) target = $region29
    $region28: #{tpu_custom_call.1} parent=1 // pred_region
      %s161 = ssub.s32 1024, 1024
      %162 = vsyncadd [#allocation9], %s161
      %s163 = sshll.u32 [#allocation8], 4
      %s164 = int_to_ptr.vmem [resolvable:$true] %s163
      %169 = dma.vmem_to_hbm [thread:$0]  %s164, 1024, %s4, [#allocation9], 128, 128, 8
    $region29: #{tpu_custom_call.1} parent=1 // pred_fallthru
      _
    // Predicated region
    $region30: #{tpu_custom_call.1} parent=1 // pred_check
      _
    $region31: #{tpu_custom_call.1} parent=1 // pred_check_branch
      %171 = sbr.rel (0) target = $region33
    $region32: #{tpu_custom_call.1} parent=1 // pred_region
      _
    $region33: #{tpu_custom_call.1} parent=1 // pred_fallthru
      _
    // Predicated region
    $region34: #{tpu_custom_call.1} parent=1 // pred_check
      _
    $region35: #{tpu_custom_call.1} parent=1 // pred_check_branch
      %173 = sbr.rel (0) target = $region37
    $region36: #{tpu_custom_call.1} parent=1 // pred_region
      %174 = dma.done [#allocation4], 2048
    $region37: #{tpu_custom_call.1} parent=1 // pred_fallthru
      _
    // Predicated region
    $region38: #{tpu_custom_call.1} parent=1 // pred_check
      _
    $region39: #{tpu_custom_call.1} parent=1 // pred_check_branch
      %176 = sbr.rel (0) target = $region41
    $region40: #{tpu_custom_call.1} parent=1 // pred_region
      %177 = dma.done [#allocation9], 1024
    $region41: #{tpu_custom_call.1} parent=1 // pred_fallthru
      _
    // Predicated region
    $region42: #{tpu_custom_call.1} parent=1 // pred_check
      _
    $region43: #{tpu_custom_call.1} parent=1 // pred_check_branch
      %179 = sbr.rel (0) target = $region45
    $region44: #{tpu_custom_call.1} parent=1 // pred_region
      _
    $region45: #{tpu_custom_call.1} parent=1 // pred_fallthru
      _
    %180 = vsyncpa [#allocation3], 1
    %181 = vsyncpa [#allocation6], 1
    %182 = vsyncpa [#allocation4], 1
    %183 = vsyncpa [#allocation9], 1

</llo_original>
